<compile_context>
chip_gen: v6e
topology: v6e:2x2x1
jax: 0.10.0
libtpu: 0.0.40
codegen_flags: <defaults>
</compile_context>

<pallas_src>
import functools

import jax
import jax.numpy as jnp
from jax.experimental import pallas as pl
from jax.experimental.pallas import tpu as pltpu


def _round_up(a, b):
    return ((a + b - 1) // b) * b


def _cdiv(a, b):
    return (a + b - 1) // b


def _ssn_kernel(x_ref, wb_ref, bb_ref, wm_ref, bm_ref, wd_ref, bd_ref,
                wf_ref, bf_ref, mean_ref, diag_ref, fac_ref,
                *, c_in, eps, chunk, n_chunks, compute_dtype):
    """One (batch, pixel-tile) grid step.

    x_ref:          (C_in, tile)  compute_dtype — pixels on the 128-lane dim.
    w*_ref / b*_ref: transposed 1x1-conv weights (out-ch rows) / f32 biases.
    outputs:        (C_out, tile), (C_out, tile), (C_out*rank, tile)  f32.
    """
    # Weights / biases are tiny; load once per grid step, outside the chunk loop.
    wb = wb_ref[...]
    bb = bb_ref[...]
    wm = wm_ref[...]
    bm = bm_ref[...]
    wd = wd_ref[...]
    bd = bd_ref[...]
    wf = wf_ref[...]
    bf = bf_ref[...]

    def chunk_body(c, carry):
        # Bounded live ranges: compute / store one `chunk`-pixel slab at a time
        # so h and the head activations stay in vregs instead of spilling.
        off = pl.multiple_of(c * chunk, chunk)
        xc = x_ref[:, pl.ds(off, chunk)]                      # (C_in, chunk)
        mask = xc[c_in - 1:c_in, :].astype(jnp.float32)       # torch: x[:, -1]

        # base_model (synthetic 1x1 conv) + LeakyReLU(0.01)
        h = jnp.dot(wb, xc, preferred_element_type=jnp.float32) + bb
        h = jnp.where(h >= 0.0, h, 0.01 * h).astype(compute_dtype)

        # Heads (1x1 convs == matmuls): mean / log_cov_diag / cov_factor.
        mean = jnp.dot(wm, h, preferred_element_type=jnp.float32) + bm
        logd = jnp.dot(wd, h, preferred_element_type=jnp.float32) + bd
        fac = jnp.dot(wf, h, preferred_element_type=jnp.float32) + bf

        # Epilogues only on the rows that need them; all stores are lane-dense.
        mean_ref[:, pl.ds(off, chunk)] = mean
        diag_ref[:, pl.ds(off, chunk)] = (jnp.exp(logd) + eps) * mask + eps
        fac_ref[:, pl.ds(off, chunk)] = fac * mask
        return carry

    jax.lax.fori_loop(0, n_chunks, chunk_body, 0, unroll=n_chunks <= 8)


def _pick_tile(*, batch, hw, c_in, c_out, c_fac, in_itemsize, chunk, max_tile):
    """Pixel-tile sized against this generation's VMEM (double-buffered I/O)."""
    # Double-buffered pipelined bytes per pixel column: input block + 3 outputs.
    io_bpp = 2 * (_round_up(c_in, 8) * in_itemsize
                  + (2 * _round_up(c_out, 8) + _round_up(c_fac, 8)) * 4)
    try:  # per-TensorCore VMEM (v5e/v6e: 128 MiB, v7x: 64 MiB)
        vmem_phys = int(pltpu.get_tpu_info().vmem_capacity_bytes)
    except Exception:  # conservative fallback = v7x per-core VMEM
        vmem_phys = 64 << 20
    budget = vmem_phys // 2  # leave headroom for weights / chunk temporaries
    tile_cap = max(chunk, min(max_tile, budget // io_bpp) // chunk * chunk)
    num_tiles = max(1, _cdiv(hw, tile_cap))
    # Keep >= 2 total grid steps so both TensorCores (v7x) get work.
    if batch * num_tiles < 2:
        num_tiles = max(num_tiles, min(2, _cdiv(hw, chunk)))
    tile = _round_up(_cdiv(hw, num_tiles), chunk)
    vmem_limit = int(min(vmem_phys * 9 // 10, 112 << 20))
    return tile, num_tiles, vmem_limit


def ssn_forward(x, params, *, rank, num_classes, epsilon,
                compute_dtype=jnp.bfloat16, chunk=512, max_tile=65536):
    """x: (B, C_in, H, W) float32, NCHW. Returns dict mirroring SSN.forward."""
    B, C_in, H, W = x.shape
    HW = H * W
    C_mid = params["w_base"].shape[1]
    C_out = num_classes
    C_fac = num_classes * rank
    compute_dtype = jnp.dtype(compute_dtype)
    f32 = jnp.float32

    tile, num_tiles, vmem_limit = _pick_tile(
        batch=B, hw=HW, c_in=C_in, c_out=C_out, c_fac=C_fac,
        in_itemsize=compute_dtype.itemsize, chunk=chunk, max_tile=max_tile)
    HW_pad = num_tiles * tile
    n_chunks = tile // chunk

    # (B, C_in, H*W): pure reshape of NCHW (no transpose copy); pad pixels.
    x_cn = x.reshape(B, C_in, HW).astype(compute_dtype)
    if HW_pad != HW:
        x_cn = jnp.pad(x_cn, ((0, 0), (0, 0), (0, HW_pad - HW)))

    # Transposed weights (rows = out channels) for the (channels, pixels) layout.
    wb = jnp.asarray(params["w_base"], f32).T.astype(compute_dtype)   # (C_mid, C_in)
    bb = jnp.asarray(params["b_base"], f32).reshape(C_mid, 1)
    wm = jnp.asarray(params["w_mean"], f32).T.astype(compute_dtype)   # (C_out, C_mid)
    bm = jnp.asarray(params["b_mean"], f32).reshape(C_out, 1)
    wd = jnp.asarray(params["w_diag"], f32).T.astype(compute_dtype)   # (C_out, C_mid)
    bd = jnp.asarray(params["b_diag"], f32).reshape(C_out, 1)
    wf = jnp.asarray(params["w_fac"], f32).T.astype(compute_dtype)    # (C_fac, C_mid)
    bf = jnp.asarray(params["b_fac"], f32).reshape(C_fac, 1)

    kernel = functools.partial(
        _ssn_kernel, c_in=C_in, eps=float(epsilon), chunk=chunk,
        n_chunks=n_chunks, compute_dtype=compute_dtype)

    def _full(rows, cols):
        return pl.BlockSpec((rows, cols), lambda b, i: (0, 0))

    def _px(rows):
        return pl.BlockSpec((None, rows, tile), lambda b, i: (b, 0, i))

    mean_p, diag_p, fac_p = pl.pallas_call(
        kernel,
        out_shape=(
            jax.ShapeDtypeStruct((B, C_out, HW_pad), f32),
            jax.ShapeDtypeStruct((B, C_out, HW_pad), f32),
            jax.ShapeDtypeStruct((B, C_fac, HW_pad), f32),
        ),
        grid_spec=pltpu.PrefetchScalarGridSpec(
            num_scalar_prefetch=0,
            grid=(B, num_tiles),
            in_specs=[
                _px(C_in),
                _full(C_mid, C_in), _full(C_mid, 1),
                _full(C_out, C_mid), _full(C_out, 1),
                _full(C_out, C_mid), _full(C_out, 1),
                _full(C_fac, C_mid), _full(C_fac, 1),
            ],
            out_specs=[_px(C_out), _px(C_out), _px(C_fac)],
        ),
        compiler_params=pltpu.CompilerParams(
            dimension_semantics=("parallel", "parallel"),
            vmem_limit_bytes=vmem_limit),
    )(x_cn, wb, bb, wm, bm, wd, bd, wf, bf)

    # Unpad (no-op view when HW_pad == HW); everything else is reshape-only —
    # the kernel output layout is already NCHW-flat (channel = r*C_out + c for
    # cov_factor, exactly the PyTorch conv channel ordering).
    logit_mean = mean_p[:, :, :HW].reshape(B, C_out, H, W)
    cov_diag_view = diag_p[:, :, :HW].reshape(B, C_out, H, W)
    cov_factor_view = fac_p[:, :, :HW].reshape(B, C_fac, H, W)

    # Flattened distribution parameters (PyTorch layouts).
    mean_flat = logit_mean.reshape(B, C_out * HW)
    cov_diag_flat = cov_diag_view.reshape(B, C_out * HW)
    cov_factor_flat = jnp.transpose(
        cov_factor_view.reshape(B, rank, C_out, HW), (0, 2, 3, 1)
    ).reshape(B, C_out * HW, rank)

    # TODO(synk): td.LowRankMultivariateNormal / ReshapedDistribution objects
    # have no Pallas equivalent; the distribution parameters are returned instead.
    return {
        "logit_mean": logit_mean,
        "cov_diag": cov_diag_view,
        "cov_factor": cov_factor_view,
        "distribution_params": {
            "mean": mean_flat,
            "cov_diag": cov_diag_flat,
            "cov_factor": cov_factor_flat,
            "event_shape": (C_out, H, W),
        },
    }


def _reference(x, params, *, rank, num_classes, epsilon,
               compute_dtype=jnp.float32):
    """Plain-JAX reference; compute_dtype emulates the kernel's bf16 casts."""
    B, C_in, H, W = x.shape
    cd = jnp.dtype(compute_dtype)
    f32 = jnp.float32
    xp = jnp.transpose(x, (0, 2, 3, 1)).reshape(-1, C_in).astype(cd)
    mask = xp[:, -1:].astype(f32)
    h = jnp.dot(xp, params["w_base"].astype(cd),
                preferred_element_type=f32) + params["b_base"]
    h = jnp.where(h >= 0, h, 0.01 * h).astype(cd)
    mean = jnp.dot(h, params["w_mean"].astype(cd),
                   preferred_element_type=f32) + params["b_mean"]
    diag = (jnp.exp(jnp.dot(h, params["w_diag"].astype(cd),
                            preferred_element_type=f32) + params["b_diag"])
            + epsilon) * mask + epsilon
    fac = (jnp.dot(h, params["w_fac"].astype(cd),
                   preferred_element_type=f32) + params["b_fac"]) * mask
    C_out = num_classes
    to_nchw = lambda a, c: jnp.transpose(a.reshape(B, H, W, c), (0, 3, 1, 2))
    return to_nchw(mean, C_out), to_nchw(diag, C_out), to_nchw(fac, C_out * rank)


if __name__ == "__main__":
    # Small deterministic config.
    B, C_in, H, W = 2, 4, 16, 16
    C_mid, C_out, rank = 32, 4, 2
    epsilon = 1e-5

    key = jax.random.PRNGKey(0)
    ks = jax.random.split(key, 10)
    params = {
        "w_base": 0.3 * jax.random.normal(ks[0], (C_in, C_mid), jnp.float32),
        "b_base": 0.1 * jax.random.normal(ks[1], (1, C_mid), jnp.float32),
        "w_mean": 0.3 * jax.random.normal(ks[2], (C_mid, C_out), jnp.float32),
        "b_mean": 0.1 * jax.random.normal(ks[3], (1, C_out), jnp.float32),
        "w_diag": 0.1 * jax.random.normal(ks[4], (C_mid, C_out), jnp.float32),
        "b_diag": 0.05 * jax.random.normal(ks[5], (1, C_out), jnp.float32),
        "w_fac": 0.3 * jax.random.normal(ks[6], (C_mid, C_out * rank), jnp.float32),
        "b_fac": 0.1 * jax.random.normal(ks[7], (1, C_out * rank), jnp.float32),
    }
    x = jax.random.normal(ks[8], (B, C_in, H, W), jnp.float32)

    out = ssn_forward(x, params, rank=rank, num_classes=C_out, epsilon=epsilon)
    jax.block_until_ready(out)

    # Tight check against a reference that applies the same bf16 casts.
    r_mean, r_diag, r_fac = _reference(x, params, rank=rank, num_classes=C_out,
                                       epsilon=epsilon, compute_dtype=jnp.bfloat16)
    assert jnp.allclose(out["logit_mean"], r_mean, atol=1e-3, rtol=1e-3)
    assert jnp.allclose(out["cov_diag"], r_diag, atol=1e-3, rtol=1e-3)
    assert jnp.allclose(out["cov_factor"], r_fac, atol=1e-3, rtol=1e-3)

    # Semantics check against the full-f32 reference (loose tol only covers
    # the wrapper-side bf16 compute cast).
    f_mean, f_diag, f_fac = _reference(x, params, rank=rank, num_classes=C_out,
                                       epsilon=epsilon, compute_dtype=jnp.float32)
    assert jnp.allclose(out["logit_mean"], f_mean, atol=5e-2, rtol=5e-2)
    assert jnp.allclose(out["cov_diag"], f_diag, atol=5e-2, rtol=5e-2)
    assert jnp.allclose(out["cov_factor"], f_fac, atol=5e-2, rtol=5e-2)

    # Distribution-parameter layouts (PyTorch: cov_factor -> (B, C*H*W, rank)).
    r_fac_flat = jnp.transpose(r_fac.reshape(B, rank, C_out, H * W),
                               (0, 2, 3, 1)).reshape(B, C_out * H * W, rank)
    assert jnp.allclose(out["distribution_params"]["cov_factor"], r_fac_flat,
                        atol=1e-3, rtol=1e-3)
    assert out["logit_mean"].shape == (B, C_out, H, W)
    assert out["cov_factor"].shape == (B, C_out * rank, H, W)
    assert out["distribution_params"]["cov_factor"].shape == (B, C_out * H * W, rank)

    # Exercise the padding path (H*W not a multiple of 128) and batch=1 grid.
    x2 = jax.random.normal(ks[9], (1, C_in, 10, 10), jnp.float32)
    out2 = ssn_forward(x2, params, rank=rank, num_classes=C_out, epsilon=epsilon)
    jax.block_until_ready(out2)
    r2_mean, r2_diag, r2_fac = _reference(x2, params, rank=rank, num_classes=C_out,
                                          epsilon=epsilon, compute_dtype=jnp.bfloat16)
    assert jnp.allclose(out2["logit_mean"], r2_mean, atol=1e-3, rtol=1e-3)
    assert jnp.allclose(out2["cov_diag"], r2_diag, atol=1e-3, rtol=1e-3)
    assert jnp.allclose(out2["cov_factor"], r2_fac, atol=1e-3, rtol=1e-3)

    print("KERNEL_OK")
</pallas_src>

<mosaic_0001>
module attributes {stable_mosaic.version = 11 : i64} {
  func.func @_ssn_kernel(%arg0: i32, %arg1: i32, %arg2: memref<1x4x512xbf16, #tpu.memory_space<vmem>>, %arg3: memref<32x4xbf16, #tpu.memory_space<vmem>>, %arg4: memref<32x1xf32, #tpu.memory_space<vmem>>, %arg5: memref<4x32xbf16, #tpu.memory_space<vmem>>, %arg6: memref<4x1xf32, #tpu.memory_space<vmem>>, %arg7: memref<4x32xbf16, #tpu.memory_space<vmem>>, %arg8: memref<4x1xf32, #tpu.memory_space<vmem>>, %arg9: memref<8x32xbf16, #tpu.memory_space<vmem>>, %arg10: memref<8x1xf32, #tpu.memory_space<vmem>>, %arg11: memref<1x4x512xf32, #tpu.memory_space<vmem>>, %arg12: memref<1x4x512xf32, #tpu.memory_space<vmem>>, %arg13: memref<1x8x512xf32, #tpu.memory_space<vmem>>) attributes {dimension_semantics = [#tpu.dimension_semantics<parallel>, #tpu.dimension_semantics<parallel>], iteration_bounds = array<i64: 2, 1>, scalar_prefetch = 0 : i64, scratch_operands = 0 : i64, tpu.core_type = #tpu.core_type<tc>, window_params = [{transform_indices = @transform_0, window_bounds = array<i64: 1, 4, 512>}, {pipeline_mode = #tpu.pipeline_mode<synchronous>, transform_indices = @transform_1, window_bounds = array<i64: 32, 4>}, {pipeline_mode = #tpu.pipeline_mode<synchronous>, transform_indices = @transform_2, window_bounds = array<i64: 32, 1>}, {pipeline_mode = #tpu.pipeline_mode<synchronous>, transform_indices = @transform_3, window_bounds = array<i64: 4, 32>}, {pipeline_mode = #tpu.pipeline_mode<synchronous>, transform_indices = @transform_4, window_bounds = array<i64: 4, 1>}, {pipeline_mode = #tpu.pipeline_mode<synchronous>, transform_indices = @transform_5, window_bounds = array<i64: 4, 32>}, {pipeline_mode = #tpu.pipeline_mode<synchronous>, transform_indices = @transform_6, window_bounds = array<i64: 4, 1>}, {pipeline_mode = #tpu.pipeline_mode<synchronous>, transform_indices = @transform_7, window_bounds = array<i64: 8, 32>}, {pipeline_mode = #tpu.pipeline_mode<synchronous>, transform_indices = @transform_8, window_bounds = array<i64: 8, 1>}, {transform_indices = @transform_9, window_bounds = array<i64: 1, 4, 512>}, {transform_indices = @transform_10, window_bounds = array<i64: 1, 4, 512>}, {transform_indices = @transform_11, window_bounds = array<i64: 1, 8, 512>}]} {
    %c0 = arith.constant 0 : index
    %c0_0 = arith.constant 0 : index
    %0 = vector.load %arg3[%c0, %c0_0] : memref<32x4xbf16, #tpu.memory_space<vmem>>, vector<32x4xbf16>
    %c0_1 = arith.constant 0 : index
    %c0_2 = arith.constant 0 : index
    %1 = vector.load %arg4[%c0_1, %c0_2] : memref<32x1xf32, #tpu.memory_space<vmem>>, vector<32x1xf32>
    %c0_3 = arith.constant 0 : index
    %c0_4 = arith.constant 0 : index
    %2 = vector.load %arg5[%c0_3, %c0_4] : memref<4x32xbf16, #tpu.memory_space<vmem>>, vector<4x32xbf16>
    %c0_5 = arith.constant 0 : index
    %c0_6 = arith.constant 0 : index
    %3 = vector.load %arg6[%c0_5, %c0_6] : memref<4x1xf32, #tpu.memory_space<vmem>>, vector<4x1xf32>
    %c0_7 = arith.constant 0 : index
    %c0_8 = arith.constant 0 : index
    %4 = vector.load %arg7[%c0_7, %c0_8] : memref<4x32xbf16, #tpu.memory_space<vmem>>, vector<4x32xbf16>
    %c0_9 = arith.constant 0 : index
    %c0_10 = arith.constant 0 : index
    %5 = vector.load %arg8[%c0_9, %c0_10] : memref<4x1xf32, #tpu.memory_space<vmem>>, vector<4x1xf32>
    %c0_11 = arith.constant 0 : index
    %c0_12 = arith.constant 0 : index
    %6 = vector.load %arg9[%c0_11, %c0_12] : memref<8x32xbf16, #tpu.memory_space<vmem>>, vector<8x32xbf16>
    %c0_13 = arith.constant 0 : index
    %c0_14 = arith.constant 0 : index
    %7 = vector.load %arg10[%c0_13, %c0_14] : memref<8x1xf32, #tpu.memory_space<vmem>>, vector<8x1xf32>
    %c0_i32 = arith.constant 0 : i32
    %c512_i32 = arith.constant 512 : i32
    %8 = arith.muli %c0_i32, %c512_i32 : i32
    %9 = tpu.assume_multiple %8, 512 : i32
    %c0_15 = arith.constant 0 : index
    %c0_16 = arith.constant 0 : index
    %10 = arith.index_cast %9 : i32 to index
    %11 = vector.load %arg2[%c0_15, %c0_16, %10] : memref<1x4x512xbf16, #tpu.memory_space<vmem>>, vector<1x4x512xbf16>
    %12 = vector.shape_cast %11 : vector<1x4x512xbf16> to vector<4x512xbf16>
    %13 = vector.extract_strided_slice %12 {offsets = [3, 0], sizes = [1, 512], strides = [1, 1]} : vector<4x512xbf16> to vector<1x512xbf16>
    %14 = arith.extf %13 : vector<1x512xbf16> to vector<1x512xf32>
    %cst = arith.constant dense<0.000000e+00> : vector<32x512xf32>
    %15 = tpu.matmul %0, %12, %cst {dimension_numbers = #tpu.dot_dimension_numbers<[1], [0], [0], [1], [0, 0, 1, 1], [], []>} : vector<32x4xbf16>, vector<4x512xbf16>, vector<32x512xf32> -> vector<32x512xf32>
    %16 = vector.broadcast %1 : vector<32x1xf32> to vector<32x512xf32>
    %17 = arith.addf %15, %16 : vector<32x512xf32>
    %cst_17 = arith.constant 0.000000e+00 : f32
    %18 = vector.broadcast %cst_17 : f32 to vector<32x512xf32>
    %19 = arith.cmpf oge, %17, %18 : vector<32x512xf32>
    %cst_18 = arith.constant 0.00999999977 : f32
    %20 = vector.broadcast %cst_18 : f32 to vector<32x512xf32>
    %21 = arith.mulf %20, %17 : vector<32x512xf32>
    %22 = arith.select %19, %17, %21 : vector<32x512xi1>, vector<32x512xf32>
    %23 = arith.truncf %22 : vector<32x512xf32> to vector<32x512xbf16>
    %cst_19 = arith.constant dense<0.000000e+00> : vector<4x512xf32>
    %24 = tpu.matmul %2, %23, %cst_19 {dimension_numbers = #tpu.dot_dimension_numbers<[1], [0], [0], [1], [0, 0, 1, 1], [], []>} : vector<4x32xbf16>, vector<32x512xbf16>, vector<4x512xf32> -> vector<4x512xf32>
    %25 = vector.broadcast %3 : vector<4x1xf32> to vector<4x512xf32>
    %26 = arith.addf %24, %25 : vector<4x512xf32>
    %cst_20 = arith.constant dense<0.000000e+00> : vector<4x512xf32>
    %27 = tpu.matmul %4, %23, %cst_20 {dimension_numbers = #tpu.dot_dimension_numbers<[1], [0], [0], [1], [0, 0, 1, 1], [], []>} : vector<4x32xbf16>, vector<32x512xbf16>, vector<4x512xf32> -> vector<4x512xf32>
    %28 = vector.broadcast %5 : vector<4x1xf32> to vector<4x512xf32>
    %29 = arith.addf %27, %28 : vector<4x512xf32>
    %cst_21 = arith.constant dense<0.000000e+00> : vector<8x512xf32>
    %30 = tpu.matmul %6, %23, %cst_21 {dimension_numbers = #tpu.dot_dimension_numbers<[1], [0], [0], [1], [0, 0, 1, 1], [], []>} : vector<8x32xbf16>, vector<32x512xbf16>, vector<8x512xf32> -> vector<8x512xf32>
    %31 = vector.broadcast %7 : vector<8x1xf32> to vector<8x512xf32>
    %32 = arith.addf %30, %31 : vector<8x512xf32>
    %c0_22 = arith.constant 0 : index
    %c0_23 = arith.constant 0 : index
    %33 = arith.index_cast %9 : i32 to index
    %34 = vector.load %arg11[%c0_22, %c0_23, %33] : memref<1x4x512xf32, #tpu.memory_space<vmem>>, vector<1x4x512xf32>
    %35 = vector.shape_cast %34 : vector<1x4x512xf32> to vector<4x512xf32>
    %36 = vector.shape_cast %26 : vector<4x512xf32> to vector<1x4x512xf32>
    tpu.vector_store %arg11[%c0_22, %c0_23, %33], %36 {strides = array<i32>} : memref<1x4x512xf32, #tpu.memory_space<vmem>>, vector<1x4x512xf32>,
    %37 = math.exp %29 : vector<4x512xf32>
    %cst_24 = arith.constant 9.99999974E-6 : f32
    %38 = vector.broadcast %cst_24 : f32 to vector<4x512xf32>
    %39 = arith.addf %37, %38 : vector<4x512xf32>
    %40 = vector.broadcast %14 : vector<1x512xf32> to vector<4x512xf32>
    %41 = arith.mulf %39, %40 : vector<4x512xf32>
    %cst_25 = arith.constant 9.99999974E-6 : f32
    %42 = vector.broadcast %cst_25 : f32 to vector<4x512xf32>
    %43 = arith.addf %41, %42 : vector<4x512xf32>
    %c0_26 = arith.constant 0 : index
    %c0_27 = arith.constant 0 : index
    %44 = arith.index_cast %9 : i32 to index
    %45 = vector.load %arg12[%c0_26, %c0_27, %44] : memref<1x4x512xf32, #tpu.memory_space<vmem>>, vector<1x4x512xf32>
    %46 = vector.shape_cast %45 : vector<1x4x512xf32> to vector<4x512xf32>
    %47 = vector.shape_cast %43 : vector<4x512xf32> to vector<1x4x512xf32>
    tpu.vector_store %arg12[%c0_26, %c0_27, %44], %47 {strides = array<i32>} : memref<1x4x512xf32, #tpu.memory_space<vmem>>, vector<1x4x512xf32>,
    %48 = vector.broadcast %14 : vector<1x512xf32> to vector<8x512xf32>
    %49 = arith.mulf %32, %48 : vector<8x512xf32>
    %c0_28 = arith.constant 0 : index
    %c0_29 = arith.constant 0 : index
    %50 = arith.index_cast %9 : i32 to index
    %51 = vector.load %arg13[%c0_28, %c0_29, %50] : memref<1x8x512xf32, #tpu.memory_space<vmem>>, vector<1x8x512xf32>
    %52 = vector.shape_cast %51 : vector<1x8x512xf32> to vector<8x512xf32>
    %53 = vector.shape_cast %49 : vector<8x512xf32> to vector<1x8x512xf32>
    tpu.vector_store %arg13[%c0_28, %c0_29, %50], %53 {strides = array<i32>} : memref<1x8x512xf32, #tpu.memory_space<vmem>>, vector<1x8x512xf32>,
    %c1_i32 = arith.constant 1 : i32
    return
  }
  func.func @transform_0(%arg0: i32, %arg1: i32) -> (i32, i32, i32) {
    %c0_i32 = arith.constant 0 : i32
    %c0_i32_0 = arith.constant 0 : i32
    return %arg0, %c0_i32, %arg1 : i32, i32, i32
  }
  func.func @transform_1(%arg0: i32, %arg1: i32) -> (i32, i32) {
    %c0_i32 = arith.constant 0 : i32
    %c0_i32_0 = arith.constant 0 : i32
    %c0_i32_1 = arith.constant 0 : i32
    return %c0_i32, %c0_i32_0 : i32, i32
  }
  func.func @transform_2(%arg0: i32, %arg1: i32) -> (i32, i32) {
    %c0_i32 = arith.constant 0 : i32
    %c0_i32_0 = arith.constant 0 : i32
    %c0_i32_1 = arith.constant 0 : i32
    return %c0_i32, %c0_i32_0 : i32, i32
  }
  func.func @transform_3(%arg0: i32, %arg1: i32) -> (i32, i32) {
    %c0_i32 = arith.constant 0 : i32
    %c0_i32_0 = arith.constant 0 : i32
    %c0_i32_1 = arith.constant 0 : i32
    return %c0_i32, %c0_i32_0 : i32, i32
  }
  func.func @transform_4(%arg0: i32, %arg1: i32) -> (i32, i32) {
    %c0_i32 = arith.constant 0 : i32
    %c0_i32_0 = arith.constant 0 : i32
    %c0_i32_1 = arith.constant 0 : i32
    return %c0_i32, %c0_i32_0 : i32, i32
  }
  func.func @transform_5(%arg0: i32, %arg1: i32) -> (i32, i32) {
    %c0_i32 = arith.constant 0 : i32
    %c0_i32_0 = arith.constant 0 : i32
    %c0_i32_1 = arith.constant 0 : i32
    return %c0_i32, %c0_i32_0 : i32, i32
  }
  func.func @transform_6(%arg0: i32, %arg1: i32) -> (i32, i32) {
    %c0_i32 = arith.constant 0 : i32
    %c0_i32_0 = arith.constant 0 : i32
    %c0_i32_1 = arith.constant 0 : i32
    return %c0_i32, %c0_i32_0 : i32, i32
  }
  func.func @transform_7(%arg0: i32, %arg1: i32) -> (i32, i32) {
    %c0_i32 = arith.constant 0 : i32
    %c0_i32_0 = arith.constant 0 : i32
    %c0_i32_1 = arith.constant 0 : i32
    return %c0_i32, %c0_i32_0 : i32, i32
  }
  func.func @transform_8(%arg0: i32, %arg1: i32) -> (i32, i32) {
    %c0_i32 = arith.constant 0 : i32
    %c0_i32_0 = arith.constant 0 : i32
    %c0_i32_1 = arith.constant 0 : i32
    return %c0_i32, %c0_i32_0 : i32, i32
  }
  func.func @transform_9(%arg0: i32, %arg1: i32) -> (i32, i32, i32) {
    %c0_i32 = arith.constant 0 : i32
    %c0_i32_0 = arith.constant 0 : i32
    return %arg0, %c0_i32, %arg1 : i32, i32, i32
  }
  func.func @transform_10(%arg0: i32, %arg1: i32) -> (i32, i32, i32) {
    %c0_i32 = arith.constant 0 : i32
    %c0_i32_0 = arith.constant 0 : i32
    return %arg0, %c0_i32, %arg1 : i32, i32, i32
  }
  func.func @transform_11(%arg0: i32, %arg1: i32) -> (i32, i32, i32) {
    %c0_i32 = arith.constant 0 : i32
    %c0_i32_0 = arith.constant 0 : i32
    return %arg0, %c0_i32, %arg1 : i32, i32, i32
  }
}

</mosaic_0001>

<llo_original>
// kernel: tpu_custom_call.1
$region0: #{tpu_custom_call.1}
  #allocation0 [shape = 'u32[]', space=smem, size = 0x4, offset = 0x4, fixed_abs, tag = 'smem constant byte address 0x4 - core index']
  #allocation1 [shape = 'u32[144,128]{1,0:T(1,128)}', space=vmem, size = 0x12000, scoped, tag = 'internal scratch']
  %s0 = inlined_call_operand.vmem [shape: bf16[2,4,512], index: 0, kind: input, shape index: {}]
  %s1 = inlined_call_operand.vmem [shape: bf16[32,4], index: 1, kind: input, shape index: {}]
  %s2 = inlined_call_operand.vmem [shape: f32[32,1], index: 2, kind: input, shape index: {}]
  %s3 = inlined_call_operand.vmem [shape: bf16[4,32], index: 3, kind: input, shape index: {}]
  %s4 = inlined_call_operand.vmem [shape: f32[4,1], index: 4, kind: input, shape index: {}]
  %s5 = inlined_call_operand.vmem [shape: bf16[4,32], index: 5, kind: input, shape index: {}]
  %s6 = inlined_call_operand.vmem [shape: f32[4,1], index: 6, kind: input, shape index: {}]
  %s7 = inlined_call_operand.vmem [shape: bf16[8,32], index: 7, kind: input, shape index: {}]
  %s8 = inlined_call_operand.vmem [shape: f32[8,1], index: 8, kind: input, shape index: {}]
  %s9 = inlined_call_operand.hbm [shape: f32[2,4,512], index: 9, kind: output, shape index: {0}]
  %s10 = inlined_call_operand.hbm [shape: f32[2,4,512], index: 10, kind: output, shape index: {1}]
  %s11 = inlined_call_operand.hbm [shape: f32[2,8,512], index: 11, kind: output, shape index: {2}]
  %12 = xla_tuple %s9, %s10, %s11
  %s13 = sld [smem:[#allocation0]]
  $region85: #{tpu_custom_call.1} parent=0
    _
  %s15 = ssub.s32 1, %s13
  %s16 = scalar_select 0, %s15, %s13
  $region1: #{tpu_custom_call.1} parent=0
    #allocation2 [shape = 'u8[16384]{0}', space=vmem, size = 0x4000, scoped, tag = 'output window, operand 0']
    #allocation3 [shape = 's32[2]{0}', space=sflag, size = 0x8, scoped, tag = 'scoped memory for tpu_custom_call.1']
    #allocation4 [shape = 'u8[16384]{0}', space=vmem, size = 0x4000, scoped, tag = 'output window, operand 1']
    #allocation5 [shape = 's32[2]{0}', space=sflag, size = 0x8, scoped, tag = 'scoped memory for tpu_custom_call.1']
    #allocation6 [shape = 'u8[32768]{0}', space=vmem, size = 0x8000, scoped, tag = 'output window, operand 2']
    %17 = vsyncpa [#allocation3], 0
    %s18 = scalar_lea.sflag [#allocation3], 1
    %19 = vsyncpa %s18, 0
    %20 = vsyncpa [#allocation5], 0
    %s21 = scalar_lea.sflag [#allocation5], 1
    %22 = vsyncpa %s21, 0
    loop: start=0, step=1, limit=4
    $region2: #{tpu_custom_call.1} parent=1 // loop_pre_header
      _
    $region3: #{tpu_custom_call.1} parent=1 // loop_header
      %s24 = sphi 0, %s28
      %p25 = scmp.ge.s32.totalorder %s24, 4
      %s31 = sphi 0, %s43
      %s32 = sphi 0, %s39
      %s33 = sphi 0, %s31
      %s34 = sphi 0, %s32
      %s35 = sphi 0, %s33
      %s36 = sphi 0, %s34
      %s48 = sphi 0, %s50
      %s51 = sphi 0, %s48
      %s52 = sphi 0, %s51
      %s68 = sphi 0, %s52
      %s72 = sphi 0, %s72
      %s74 = sphi 0, %s72
      %s75 = sphi 0, %s74
      %s89 = sphi 0, %s75
      %s93 = sphi 0, %s93
      %s95 = sphi 0, %s93
      %s96 = sphi 0, %s95
      %s110 = sphi 0, %s96
      %s114 = sphi 0, %s114
      %s116 = sphi 0, %s114
      %s117 = sphi 0, %s116
      %s131 = sphi 0, %s117
      %s135 = sphi 0, %s135
      %s137 = sphi 0, %s135
      %s138 = sphi 0, %s137
      %s152 = sphi 0, %s138
      %s156 = sphi 0, %s156
      %s158 = sphi 0, %s156
      %s159 = sphi 0, %s158
      %s173 = sphi 0, %s159
      %s177 = sphi 0, %s177
      %s179 = sphi 0, %s177
      %s180 = sphi 0, %s179
      %s194 = sphi 0, %s180
      %s198 = sphi 0, %s198
      %s200 = sphi 0, %s198
      %s201 = sphi 0, %s200
      %s215 = sphi 0, %s201
      %s219 = sphi 0, %s219
      %s221 = sphi 0, %s219
      %s222 = sphi 0, %s221
      %s236 = sphi 0, %s222
      %s244 = sphi 0, %s246
      %s247 = sphi 0, %s244
      %s248 = sphi 0, %s247
      %s264 = sphi 0, %s248
      %s272 = sphi 0, %s274
      %s275 = sphi 0, %s272
      %s276 = sphi 0, %s275
      %s292 = sphi 0, %s276
      %s300 = sphi 0, %s302
      %s303 = sphi 0, %s300
      %s304 = sphi 0, %s303
      %s320 = sphi 0, %s304
    $region4: #{tpu_custom_call.1} parent=1 // loop_header_branch
      %27 = sbr.rel (%p25) target = $region8
    $region5: #{tpu_custom_call.1} parent=1 // loop_body
      %s29 = ssub.s32 %s24, 1
      %s30 = ssub.s32 %s24, 2
      %s37 = sadd.s32 1, %s32
      %p38 = scmp.ge.s32.totalorder %s37, 1
      %s39 = scalar_select %p38, 0, %s37
      %s40 = sadd.s32 1, %s31
      %s41 = scalar_select %p38, %s40, %s31
      %p42 = scmp.ge.s32.totalorder %s41, 2
      %s43 = scalar_select %p42, 0, %s41
      %s44 = ssub.s32 %s31, %s43
      %s45 = ssub.s32 %s32, %s39
      %s46 = sor.u32 %s44, %s45
      %p47 = scmp.eq.s32.totalorder %s46, 0
      %s49 = sadd.s32 %s48, 1
      %s50 = scalar_select %p47, %s48, %s49
      %p53 = pneg %p47
      %p54 = scmp.eq.s32.totalorder %s24, 1
      %p55 = por %p53, %p54
      %p56 = scmp.ne.s32.totalorder %s48, %s51
      %p57 = scmp.eq.s32.totalorder %s24, 0
      %p58 = por %p56, %p57
      %p59 = scmp.ne.s32.totalorder %s48, %s51
      %p60 = scmp.eq.s32.totalorder %s29, 1
      %p61 = por %p59, %p60
      %p62 = scmp.ne.s32.totalorder %s51, %s52
      %p63 = scmp.eq.s32.totalorder %s29, 0
      %p64 = por %p62, %p63
      %p65 = scmp.ne.s32.totalorder %s51, %s52
      %p66 = scmp.eq.s32.totalorder %s30, 1
      %p67 = por %p65, %p66
      %p69 = scmp.ne.s32.totalorder %s52, %s68
      %p70 = scmp.eq.s32.totalorder %s30, 0
      %p71 = por %p69, %p70
      %s73 = sadd.s32 %s72, 1
      %p76 = scmp.eq.s32.totalorder %s24, 1
      %p77 = scmp.ne.s32.totalorder %s72, %s74
      %p78 = scmp.eq.s32.totalorder %s24, 0
      %p79 = por %p77, %p78
      %p80 = scmp.ne.s32.totalorder %s72, %s74
      %p81 = scmp.eq.s32.totalorder %s29, 1
      %p82 = por %p80, %p81
      %p83 = scmp.ne.s32.totalorder %s74, %s75
      %p84 = scmp.eq.s32.totalorder %s29, 0
      %p85 = por %p83, %p84
      %p86 = scmp.ne.s32.totalorder %s74, %s75
      %p87 = scmp.eq.s32.totalorder %s30, 1
      %p88 = por %p86, %p87
      %p90 = scmp.ne.s32.totalorder %s75, %s89
      %p91 = scmp.eq.s32.totalorder %s30, 0
      %p92 = por %p90, %p91
      %s94 = sadd.s32 %s93, 1
      %p97 = scmp.eq.s32.totalorder %s24, 1
      %p98 = scmp.ne.s32.totalorder %s93, %s95
      %p99 = scmp.eq.s32.totalorder %s24, 0
      %p100 = por %p98, %p99
      %p101 = scmp.ne.s32.totalorder %s93, %s95
      %p102 = scmp.eq.s32.totalorder %s29, 1
      %p103 = por %p101, %p102
      %p104 = scmp.ne.s32.totalorder %s95, %s96
      %p105 = scmp.eq.s32.totalorder %s29, 0
      %p106 = por %p104, %p105
      %p107 = scmp.ne.s32.totalorder %s95, %s96
      %p108 = scmp.eq.s32.totalorder %s30, 1
      %p109 = por %p107, %p108
      %p111 = scmp.ne.s32.totalorder %s96, %s110
      %p112 = scmp.eq.s32.totalorder %s30, 0
      %p113 = por %p111, %p112
      %s115 = sadd.s32 %s114, 1
      %p118 = scmp.eq.s32.totalorder %s24, 1
      %p119 = scmp.ne.s32.totalorder %s114, %s116
      %p120 = scmp.eq.s32.totalorder %s24, 0
      %p121 = por %p119, %p120
      %p122 = scmp.ne.s32.totalorder %s114, %s116
      %p123 = scmp.eq.s32.totalorder %s29, 1
      %p124 = por %p122, %p123
      %p125 = scmp.ne.s32.totalorder %s116, %s117
      %p126 = scmp.eq.s32.totalorder %s29, 0
      %p127 = por %p125, %p126
      %p128 = scmp.ne.s32.totalorder %s116, %s117
      %p129 = scmp.eq.s32.totalorder %s30, 1
      %p130 = por %p128, %p129
      %p132 = scmp.ne.s32.totalorder %s117, %s131
      %p133 = scmp.eq.s32.totalorder %s30, 0
      %p134 = por %p132, %p133
      %s136 = sadd.s32 %s135, 1
      %p139 = scmp.eq.s32.totalorder %s24, 1
      %p140 = scmp.ne.s32.totalorder %s135, %s137
      %p141 = scmp.eq.s32.totalorder %s24, 0
      %p142 = por %p140, %p141
      %p143 = scmp.ne.s32.totalorder %s135, %s137
      %p144 = scmp.eq.s32.totalorder %s29, 1
      %p145 = por %p143, %p144
      %p146 = scmp.ne.s32.totalorder %s137, %s138
      %p147 = scmp.eq.s32.totalorder %s29, 0
      %p148 = por %p146, %p147
      %p149 = scmp.ne.s32.totalorder %s137, %s138
      %p150 = scmp.eq.s32.totalorder %s30, 1
      %p151 = por %p149, %p150
      %p153 = scmp.ne.s32.totalorder %s138, %s152
      %p154 = scmp.eq.s32.totalorder %s30, 0
      %p155 = por %p153, %p154
      %s157 = sadd.s32 %s156, 1
      %p160 = scmp.eq.s32.totalorder %s24, 1
      %p161 = scmp.ne.s32.totalorder %s156, %s158
      %p162 = scmp.eq.s32.totalorder %s24, 0
      %p163 = por %p161, %p162
      %p164 = scmp.ne.s32.totalorder %s156, %s158
      %p165 = scmp.eq.s32.totalorder %s29, 1
      %p166 = por %p164, %p165
      %p167 = scmp.ne.s32.totalorder %s158, %s159
      %p168 = scmp.eq.s32.totalorder %s29, 0
      %p169 = por %p167, %p168
      %p170 = scmp.ne.s32.totalorder %s158, %s159
      %p171 = scmp.eq.s32.totalorder %s30, 1
      %p172 = por %p170, %p171
      %p174 = scmp.ne.s32.totalorder %s159, %s173
      %p175 = scmp.eq.s32.totalorder %s30, 0
      %p176 = por %p174, %p175
      %s178 = sadd.s32 %s177, 1
      %p181 = scmp.eq.s32.totalorder %s24, 1
      %p182 = scmp.ne.s32.totalorder %s177, %s179
      %p183 = scmp.eq.s32.totalorder %s24, 0
      %p184 = por %p182, %p183
      %p185 = scmp.ne.s32.totalorder %s177, %s179
      %p186 = scmp.eq.s32.totalorder %s29, 1
      %p187 = por %p185, %p186
      %p188 = scmp.ne.s32.totalorder %s179, %s180
      %p189 = scmp.eq.s32.totalorder %s29, 0
      %p190 = por %p188, %p189
      %p191 = scmp.ne.s32.totalorder %s179, %s180
      %p192 = scmp.eq.s32.totalorder %s30, 1
      %p193 = por %p191, %p192
      %p195 = scmp.ne.s32.totalorder %s180, %s194
      %p196 = scmp.eq.s32.totalorder %s30, 0
      %p197 = por %p195, %p196
      %s199 = sadd.s32 %s198, 1
      %p202 = scmp.eq.s32.totalorder %s24, 1
      %p203 = scmp.ne.s32.totalorder %s198, %s200
      %p204 = scmp.eq.s32.totalorder %s24, 0
      %p205 = por %p203, %p204
      %p206 = scmp.ne.s32.totalorder %s198, %s200
      %p207 = scmp.eq.s32.totalorder %s29, 1
      %p208 = por %p206, %p207
      %p209 = scmp.ne.s32.totalorder %s200, %s201
      %p210 = scmp.eq.s32.totalorder %s29, 0
      %p211 = por %p209, %p210
      %p212 = scmp.ne.s32.totalorder %s200, %s201
      %p213 = scmp.eq.s32.totalorder %s30, 1
      %p214 = por %p212, %p213
      %p216 = scmp.ne.s32.totalorder %s201, %s215
      %p217 = scmp.eq.s32.totalorder %s30, 0
      %p218 = por %p216, %p217
      %s220 = sadd.s32 %s219, 1
      %p223 = scmp.eq.s32.totalorder %s24, 1
      %p224 = scmp.ne.s32.totalorder %s219, %s221
      %p225 = scmp.eq.s32.totalorder %s24, 0
      %p226 = por %p224, %p225
      %p227 = scmp.ne.s32.totalorder %s219, %s221
      %p228 = scmp.eq.s32.totalorder %s29, 1
      %p229 = por %p227, %p228
      %p230 = scmp.ne.s32.totalorder %s221, %s222
      %p231 = scmp.eq.s32.totalorder %s29, 0
      %p232 = por %p230, %p231
      %p233 = scmp.ne.s32.totalorder %s221, %s222
      %p234 = scmp.eq.s32.totalorder %s30, 1
      %p235 = por %p233, %p234
      %p237 = scmp.ne.s32.totalorder %s222, %s236
      %p238 = scmp.eq.s32.totalorder %s30, 0
      %p239 = por %p237, %p238
      %s240 = ssub.s32 %s31, %s43
      %s241 = ssub.s32 %s32, %s39
      %s242 = sor.u32 %s240, %s241
      %p243 = scmp.eq.s32.totalorder %s242, 0
      %s245 = sadd.s32 %s244, 1
      %s246 = scalar_select %p243, %s244, %s245
      %p249 = pneg %p243
      %p250 = scmp.eq.s32.totalorder %s24, 1
      %p251 = por %p249, %p250
      %p252 = scmp.ne.s32.totalorder %s244, %s247
      %p253 = scmp.eq.s32.totalorder %s24, 0
      %p254 = por %p252, %p253
      %p255 = scmp.ne.s32.totalorder %s244, %s247
      %p256 = scmp.eq.s32.totalorder %s29, 1
      %p257 = por %p255, %p256
      %p258 = scmp.ne.s32.totalorder %s247, %s248
      %p259 = scmp.eq.s32.totalorder %s29, 0
      %p260 = por %p258, %p259
      %p261 = scmp.ne.s32.totalorder %s247, %s248
      %p262 = scmp.eq.s32.totalorder %s30, 1
      %p263 = por %p261, %p262
      %p265 = scmp.ne.s32.totalorder %s248, %s264
      %p266 = scmp.eq.s32.totalorder %s30, 0
      %p267 = por %p265, %p266
      %s268 = ssub.s32 %s31, %s43
      %s269 = ssub.s32 %s32, %s39
      %s270 = sor.u32 %s268, %s269
      %p271 = scmp.eq.s32.totalorder %s270, 0
      %s273 = sadd.s32 %s272, 1
      %s274 = scalar_select %p271, %s272, %s273
      %p277 = pneg %p271
      %p278 = scmp.eq.s32.totalorder %s24, 1
      %p279 = por %p277, %p278
      %p280 = scmp.ne.s32.totalorder %s272, %s275
      %p281 = scmp.eq.s32.totalorder %s24, 0
      %p282 = por %p280, %p281
      %p283 = scmp.ne.s32.totalorder %s272, %s275
      %p284 = scmp.eq.s32.totalorder %s29, 1
      %p285 = por %p283, %p284
      %p286 = scmp.ne.s32.totalorder %s275, %s276
      %p287 = scmp.eq.s32.totalorder %s29, 0
      %p288 = por %p286, %p287
      %p289 = scmp.ne.s32.totalorder %s275, %s276
      %p290 = scmp.eq.s32.totalorder %s30, 1
      %p291 = por %p289, %p290
      %p293 = scmp.ne.s32.totalorder %s276, %s292
      %p294 = scmp.eq.s32.totalorder %s30, 0
      %p295 = por %p293, %p294
      %s296 = ssub.s32 %s31, %s43
      %s297 = ssub.s32 %s32, %s39
      %s298 = sor.u32 %s296, %s297
      %p299 = scmp.eq.s32.totalorder %s298, 0
      %s301 = sadd.s32 %s300, 1
      %s302 = scalar_select %p299, %s300, %s301
      %p305 = pneg %p299
      %p306 = scmp.eq.s32.totalorder %s24, 1
      %p307 = por %p305, %p306
      %p308 = scmp.ne.s32.totalorder %s300, %s303
      %p309 = scmp.eq.s32.totalorder %s24, 0
      %p310 = por %p308, %p309
      %p311 = scmp.ne.s32.totalorder %s300, %s303
      %p312 = scmp.eq.s32.totalorder %s29, 1
      %p313 = por %p311, %p312
      %p314 = scmp.ne.s32.totalorder %s303, %s304
      %p315 = scmp.eq.s32.totalorder %s29, 0
      %p316 = por %p314, %p315
      %p317 = scmp.ne.s32.totalorder %s303, %s304
      %p318 = scmp.eq.s32.totalorder %s30, 1
      %p319 = por %p317, %p318
      %p321 = scmp.ne.s32.totalorder %s304, %s320
      %p322 = scmp.eq.s32.totalorder %s30, 0
      %p323 = por %p321, %p322
      %p324 = scmp.le.s32.totalorder 1, %s24
      %p325 = scmp.lt.s32.totalorder %s24, 3
      %p326 = pnand %p324, %p325
      %p327 = pneg %p326
      // Predicated region
      $region9: #{tpu_custom_call.1} parent=5 // pred_check
        _
      $region10: #{tpu_custom_call.1} parent=5 // pred_check_branch
        %329 = sbr.rel (%p326) target = $region12
      $region11: #{tpu_custom_call.1} parent=5 // pred_region
        %s330 = ssub.s32 %s24, 1
        // Predicated region
        $region13: #{tpu_custom_call.1} parent=11 // pred_check
          %p331 = pneg %p85
        $region14: #{tpu_custom_call.1} parent=11 // pred_check_branch
          %333 = sbr.rel (%p331) target = $region16
        $region15: #{tpu_custom_call.1} parent=11 // pred_region
          _
        $region16: #{tpu_custom_call.1} parent=11 // pred_fallthru
          _
        // Predicated region
        $region17: #{tpu_custom_call.1} parent=11 // pred_check
          %p334 = pneg %p106
        $region18: #{tpu_custom_call.1} parent=11 // pred_check_branch
          %336 = sbr.rel (%p334) target = $region20
        $region19: #{tpu_custom_call.1} parent=11 // pred_region
          _
        $region20: #{tpu_custom_call.1} parent=11 // pred_fallthru
          _
        // Predicated region
        $region21: #{tpu_custom_call.1} parent=11 // pred_check
          %p337 = pneg %p127
        $region22: #{tpu_custom_call.1} parent=11 // pred_check_branch
          %339 = sbr.rel (%p337) target = $region24
        $region23: #{tpu_custom_call.1} parent=11 // pred_region
          _
        $region24: #{tpu_custom_call.1} parent=11 // pred_fallthru
          _
        // Predicated region
        $region25: #{tpu_custom_call.1} parent=11 // pred_check
          %p340 = pneg %p148
        $region26: #{tpu_custom_call.1} parent=11 // pred_check_branch
          %342 = sbr.rel (%p340) target = $region28
        $region27: #{tpu_custom_call.1} parent=11 // pred_region
          _
        $region28: #{tpu_custom_call.1} parent=11 // pred_fallthru
          _
        // Predicated region
        $region29: #{tpu_custom_call.1} parent=11 // pred_check
          %p343 = pneg %p169
        $region30: #{tpu_custom_call.1} parent=11 // pred_check_branch
          %345 = sbr.rel (%p343) target = $region32
        $region31: #{tpu_custom_call.1} parent=11 // pred_region
          _
        $region32: #{tpu_custom_call.1} parent=11 // pred_fallthru
          _
        // Predicated region
        $region33: #{tpu_custom_call.1} parent=11 // pred_check
          %p346 = pneg %p190
        $region34: #{tpu_custom_call.1} parent=11 // pred_check_branch
          %348 = sbr.rel (%p346) target = $region36
        $region35: #{tpu_custom_call.1} parent=11 // pred_region
          _
        $region36: #{tpu_custom_call.1} parent=11 // pred_fallthru
          _
        // Predicated region
        $region37: #{tpu_custom_call.1} parent=11 // pred_check
          %p349 = pneg %p211
        $region38: #{tpu_custom_call.1} parent=11 // pred_check_branch
          %351 = sbr.rel (%p349) target = $region40
        $region39: #{tpu_custom_call.1} parent=11 // pred_region
          _
        $region40: #{tpu_custom_call.1} parent=11 // pred_fallthru
          _
        // Predicated region
        $region41: #{tpu_custom_call.1} parent=11 // pred_check
          %p352 = pneg %p232
        $region42: #{tpu_custom_call.1} parent=11 // pred_check_branch
          %354 = sbr.rel (%p352) target = $region44
        $region43: #{tpu_custom_call.1} parent=11 // pred_region
          _
        $region44: #{tpu_custom_call.1} parent=11 // pred_fallthru
          _
      $region12: #{tpu_custom_call.1} parent=5 // pred_fallthru
        _
      %p355 = scmp.lt.s32.totalorder %s24, 2
      // Predicated region
      $region45: #{tpu_custom_call.1} parent=5 // pred_check
        %p356 = pneg %p355
      $region46: #{tpu_custom_call.1} parent=5 // pred_check_branch
        %358 = sbr.rel (%p356) target = $region48
      $region47: #{tpu_custom_call.1} parent=5 // pred_region
        // Predicated region
        $region49: #{tpu_custom_call.1} parent=47 // pred_check
          %p359 = pneg %p58
        $region50: #{tpu_custom_call.1} parent=47 // pred_check_branch
          %361 = sbr.rel (%p359) target = $region52
        $region51: #{tpu_custom_call.1} parent=47 // pred_region
          %s362 = smul.u32 4, %s32
          %p363 = scmp.lt.s32.totalorder %s31, 1
          %s364 = scalar_select %p363, %s31, 1
          %p365 = scmp.lt.s32.totalorder %s362, 3
          %s366 = scalar_select %p365, %s362, 3
          %s367 = smul.addr %s364, 4
          %s368 = sadd.s32 %s366, %s367
          %s369 = smul.addr %s368, 2
          %s370 = scalar_lea.vmem %s0, %s369
          %s371 = smul.u32 4, %s32
        $region52: #{tpu_custom_call.1} parent=47 // pred_fallthru
          _
      $region48: #{tpu_custom_call.1} parent=5 // pred_fallthru
        _
      %p372 = scmp.le.s32.totalorder 1, %s24
      %p373 = scmp.lt.s32.totalorder %s24, 3
      %p374 = pnand %p372, %p373
      %p375 = pneg %p374
      // Predicated region
      $region53: #{tpu_custom_call.1} parent=5 // pred_check
        _
      $region54: #{tpu_custom_call.1} parent=5 // pred_check_branch
        %377 = sbr.rel (%p374) target = $region56
      $region55: #{tpu_custom_call.1} parent=5 // pred_region
        %s378 = ssub.s32 %s24, 1
        %s379 = smul.u32 4, %s34
        %p380 = scmp.lt.s32.totalorder %s33, 1
        %s381 = scalar_select %p380, %s33, 1
        %p382 = scmp.lt.s32.totalorder %s379, 3
        %s383 = scalar_select %p382, %s379, 3
        %s384 = smul.addr %s381, 4
        %s385 = sadd.s32 %s383, %s384
        %s386 = smul.addr %s385, 2
        %s387 = scalar_lea.vmem %s0, %s386
        %p388 = pneg %p64
        %p389 = pneg %p61
        %p390 = pneg %p85
        %p391 = pneg %p82
        %p392 = pneg %p106
        %p393 = pneg %p103
        %p394 = pneg %p127
        %p395 = pneg %p124
        %p396 = pneg %p148
        %p397 = pneg %p145
        %p398 = pneg %p169
        %p399 = pneg %p166
        %p400 = pneg %p190
        %p401 = pneg %p187
        %p402 = pneg %p211
        %p403 = pneg %p208
        %p404 = pneg %p232
        %p405 = pneg %p229
        %p406 = pneg %p260
        %p407 = pneg %p257
        %s408 = sand.u32 %s247, 1
        %s409 = scalar_lea.sflag [#allocation3], %s408
        %s410 = sand.u32 %s247, 1
        %s411 = smul.addr %s410, 16
        %s412 = scalar_lea.vmem [#allocation2], %s411
        %p413 = pneg %p288
        %p414 = pneg %p285
        %s415 = sand.u32 %s29, 1
        %s416 = scalar_lea.sflag [#allocation5], %s415
        %s417 = sand.u32 %s275, 1
        %s418 = smul.addr %s417, 16
        %s419 = scalar_lea.vmem [#allocation4], %s418
        %p420 = pneg %p316
        %p421 = pneg %p313
        %s422 = sand.u32 %s29, 1
        %s423 = scalar_lea.sflag [#allocation5], %s422
        %s424 = sand.u32 %s303, 1
        %s425 = smul.addr %s424, 32
        %s426 = scalar_lea.vmem [#allocation6], %s425
        %s427 = smul.u32 4, %s34
        %p428 = scmp.lt.s32.totalorder %s33, 1
        %s429 = scalar_select %p428, %s33, 1
        %p430 = scmp.lt.s32.totalorder %s427, 3
        %s431 = scalar_select %p430, %s427, 3
        %s432 = smul.addr %s429, 4
        %s433 = sadd.s32 %s431, %s432
        %s434 = smul.addr %s433, 2
        %s435 = scalar_lea.vmem %s0, %s434
        %s436 = smul.u32 4, %s34
        %s437 = smul.u32 4, %s34
        %s438 = smul.u32 4, %s34
        %s439 = smul.u32 4, %s34
        %v441 = vld [vmem:[%s1] sm:$0xf]
        %v442 = vld [vmem:[%s1 + $0x4] sm:$0xf]
        %v443 = vld [vmem:[%s1 + $0x8] sm:$0xf]
        %v444 = vld [vmem:[%s1 + $0xc] sm:$0xf]
        %v445 = vld [vmem:[%s2] sm:$0xff]
        %v446 = vld [vmem:[%s2 + $0x8] sm:$0xff]
        %v447 = vld [vmem:[%s2 + $0x10] sm:$0xff]
        %v448 = vld [vmem:[%s2 + $0x18] sm:$0xff]
        %v449 = vld [vmem:[%s3] sm:$0x3]
        %v450 = vld [vmem:[%s4] sm:$0xf]
        %v451 = vld [vmem:[%s5] sm:$0x3]
        %v452 = vld [vmem:[%s6] sm:$0xf]
        %v453 = vld [vmem:[%s7] sm:$0xf]
        %v454 = vld [vmem:[%s8] sm:$0xff]
        %v455 = vld [vmem:[%s435] sm:$0xff]
        %v456 = vunpack.c.l.bf16 %v455
        %v457 = vunpack.c.h.bf16 %v455
        %459 = vset.pattern.permute.xlu0 0
        %460 = vperm.xlu0 %459, %v445
        %v461 = vpop.permute.xlu0 %460
        %464 = vset.pattern.permute.xlu0 0
        %465 = vperm.xlu0 %464, %v446
        %v466 = vpop.permute.xlu0 %465
        %469 = vset.pattern.permute.xlu0 0
        %470 = vperm.xlu0 %469, %v447
        %v471 = vpop.permute.xlu0 %470
        %474 = vset.pattern.permute.xlu0 0
        %475 = vperm.xlu0 %474, %v448
        %v476 = vpop.permute.xlu0 %475
        %v482 = vunpack.c.l.b16 %v441
        %v483 = vunpack.c.l.b16 %v442
        %v484 = vunpack.c.l.b16 %v443
        %v485 = vunpack.c.l.b16 %v444
        %v486 = vpack.c.b16 %v483, %v482
        %v487 = vpack.c.b16 %v485, %v484
        %v489 = vcombine.high %v455, %v455
        %v491 = vunpack.c.l.s4 1983009808
        %v492 = vunpack.c.0.s8 %v491
        %v493 = vlaneseq
        %v494 = vshrl.u32 %v493, 7
        %v495 = vsub.s32 %v492, %v494
        %v496 = vrot.slane %v455, %v495
        %v498 = vunpack.c.l.s4 1983009808
        %v499 = vunpack.c.0.s8 %v498
        %v500 = vlaneseq
        %v501 = vshrl.u32 %v500, 7
        %v502 = vsub.s32 %v499, %v501
        %v503 = vrot.slane %v489, %v502
        %v504 = vcombine.high %v496, %v496
        %v505 = vcombine.high %v503, %v503
        %vm506 = vcmask 31744
        %v508 = vsel %vm506, %v486, 0
        %v511 = vsel %vm506, %v487, 0
        %vm513 = vcmask 1041408
        %v515 = vsel %vm513, %v496, 0
        %v518 = vsel %vm513, %v504, 0
        %v521 = vsel %vm513, %v503, 0
        %v524 = vsel %vm513, %v505, 0
        %526 = vmatprep.subr.bf16.mxu0 0
        %527 = vmatpush1.bf16.msra.mxu0 0
        %528 = vmatprep.subr.bf16.mxu0 0
        %529 = vmatpush1.bf16.msra.mxu0 0
        %530 = vmatprep.subr.bf16.mxu0 0
        %531 = vmatpush1.bf16.msra.mxu0 0
        %532 = vmatprep.subr.bf16.mxu0 0
        %533 = vmatpush1.bf16.msra.mxu0 0
        %534 = vmatprep.subr.bf16.mxu0 0
        %535 = vmatpush1.bf16.msra.mxu0 0
        %536 = vmatprep.subr.bf16.mxu0 0
        %537 = vmatpush1.bf16.msra.mxu0 0
        %538 = vmatprep.subr.bf16.mxu0 0
        %539 = vmatpush1.bf16.msra.mxu0 0
        %540 = vmatprep.subr.bf16.mxu0 %v518
        %541 = vmatpush1.bf16.msra.mxu0 %v515
        %542 = vmatprep.subr.bf16.mxu0 0
        %543 = vmatpush2.bf16.msra.mxu0 0
        %544 = vmatprep.subr.bf16.mxu0 0
        %545 = vmatpush2.bf16.msra.mxu0 0
        %546 = vmatprep.subr.bf16.mxu0 0
        %547 = vmatpush2.bf16.msra.mxu0 0
        %548 = vmatprep.subr.bf16.mxu0 0
        %549 = vmatpush2.bf16.msra.mxu0 0
        %550 = vmatprep.subr.bf16.mxu0 0
        %551 = vmatpush2.bf16.msra.mxu0 0
        %552 = vmatprep.subr.bf16.mxu0 0
        %553 = vmatpush2.bf16.msra.mxu0 0
        %554 = vmatprep.subr.bf16.mxu0 0
        %555 = vmatpush2.bf16.msra.mxu0 0
        %556 = vmatprep.subr.bf16.mxu0 0
        %557 = vmatpush2.bf16.msra.mxu0 0
        %558 = vmatprep.mubr.bf16.mxu0 0
        %559 = vmatmul.mubr.bf16.gmra.mxu0 %v508
        %v560 = vpop.f32.mrf.mxu0
        %v561 = vadd.f32 %v461, %v560
        %v562 = vpop.f32.mrf.mxu0
        %v563 = vadd.f32 %v461, %v562
        %v564 = vpop.f32.mrf.mxu0
        %v565 = vadd.f32 %v466, %v564
        %v566 = vpop.f32.mrf.mxu0
        %v567 = vadd.f32 %v466, %v566
        %568 = vmatprep.mubr.bf16.mxu0 0
        %569 = vmatmul.mubr.bf16.gmra.mxu0 %v511
        %v570 = vpop.f32.mrf.mxu0
        %v571 = vadd.f32 %v471, %v570
        %v572 = vpop.f32.mrf.mxu0
        %v573 = vadd.f32 %v471, %v572
        %v574 = vpop.f32.mrf.mxu0
        %v575 = vadd.f32 %v476, %v574
        %v576 = vpop.f32.mrf.mxu0
        %v577 = vadd.f32 %v476, %v576
        %578 = vdwg.mxu0
        %579 = vmatprep.subr.bf16.mxu0 0
        %580 = vmatpush1.bf16.msra.mxu0 0
        %581 = vmatprep.subr.bf16.mxu0 0
        %582 = vmatpush1.bf16.msra.mxu0 0
        %583 = vmatprep.subr.bf16.mxu0 0
        %584 = vmatpush1.bf16.msra.mxu0 0
        %585 = vmatprep.subr.bf16.mxu0 0
        %586 = vmatpush1.bf16.msra.mxu0 0
        %587 = vmatprep.subr.bf16.mxu0 0
        %588 = vmatpush1.bf16.msra.mxu0 0
        %589 = vmatprep.subr.bf16.mxu0 0
        %590 = vmatpush1.bf16.msra.mxu0 0
        %591 = vmatprep.subr.bf16.mxu0 0
        %592 = vmatpush1.bf16.msra.mxu0 0
        %593 = vmatprep.subr.bf16.mxu0 %v524
        %594 = vmatpush1.bf16.msra.mxu0 %v521
        %595 = vmatprep.subr.bf16.mxu0 0
        %596 = vmatpush2.bf16.msra.mxu0 0
        %597 = vmatprep.subr.bf16.mxu0 0
        %598 = vmatpush2.bf16.msra.mxu0 0
        %599 = vmatprep.subr.bf16.mxu0 0
        %600 = vmatpush2.bf16.msra.mxu0 0
        %601 = vmatprep.subr.bf16.mxu0 0
        %602 = vmatpush2.bf16.msra.mxu0 0
        %603 = vmatprep.subr.bf16.mxu0 0
        %604 = vmatpush2.bf16.msra.mxu0 0
        %605 = vmatprep.subr.bf16.mxu0 0
        %606 = vmatpush2.bf16.msra.mxu0 0
        %607 = vmatprep.subr.bf16.mxu0 0
        %608 = vmatpush2.bf16.msra.mxu0 0
        %609 = vmatprep.subr.bf16.mxu0 0
        %610 = vmatpush2.bf16.msra.mxu0 0
        %611 = vmatprep.mubr.bf16.mxu0 0
        %612 = vmatmul.mubr.bf16.gmra.mxu0 %v508
        %v613 = vpop.f32.mrf.mxu0
        %v614 = vadd.f32 %v461, %v613
        %v615 = vpop.f32.mrf.mxu0
        %v616 = vadd.f32 %v461, %v615
        %v617 = vpop.f32.mrf.mxu0
        %v618 = vadd.f32 %v466, %v617
        %v619 = vpop.f32.mrf.mxu0
        %v620 = vadd.f32 %v466, %v619
        %621 = vmatprep.mubr.bf16.mxu0 0
        %622 = vmatmul.mubr.bf16.gmra.mxu0 %v511
        %v623 = vpop.f32.mrf.mxu0
        %v624 = vadd.f32 %v471, %v623
        %v625 = vpop.f32.mrf.mxu0
        %v626 = vadd.f32 %v471, %v625
        %v627 = vpop.f32.mrf.mxu0
        %v628 = vadd.f32 %v476, %v627
        %v629 = vpop.f32.mrf.mxu0
        %v630 = vadd.f32 %v476, %v629
        %631 = vdwg.mxu0
        %vm632 = vcmp.ge.f32.partialorder %v561, 0.0
        %vm633 = vcmp.ge.f32.partialorder %v563, 0.0
        %vm634 = vcmp.ge.f32.partialorder %v614, 0.0
        %vm635 = vcmp.ge.f32.partialorder %v616, 0.0
        %vm636 = vcmp.ge.f32.partialorder %v565, 0.0
        %vm637 = vcmp.ge.f32.partialorder %v567, 0.0
        %vm638 = vcmp.ge.f32.partialorder %v618, 0.0
        %vm639 = vcmp.ge.f32.partialorder %v620, 0.0
        %vm640 = vcmp.ge.f32.partialorder %v571, 0.0
        %vm641 = vcmp.ge.f32.partialorder %v573, 0.0
        %vm642 = vcmp.ge.f32.partialorder %v624, 0.0
        %vm643 = vcmp.ge.f32.partialorder %v626, 0.0
        %vm644 = vcmp.ge.f32.partialorder %v575, 0.0
        %vm645 = vcmp.ge.f32.partialorder %v577, 0.0
        %vm646 = vcmp.ge.f32.partialorder %v628, 0.0
        %vm647 = vcmp.ge.f32.partialorder %v630, 0.0
        %v648 = vmul.f32 %v561, 0.01
        %v649 = vmul.f32 %v563, 0.01
        %v650 = vmul.f32 %v614, 0.01
        %v651 = vmul.f32 %v616, 0.01
        %v652 = vmul.f32 %v565, 0.01
        %v653 = vmul.f32 %v567, 0.01
        %v654 = vmul.f32 %v618, 0.01
        %v655 = vmul.f32 %v620, 0.01
        %v656 = vmul.f32 %v571, 0.01
        %v657 = vmul.f32 %v573, 0.01
        %v658 = vmul.f32 %v624, 0.01
        %v659 = vmul.f32 %v626, 0.01
        %v660 = vmul.f32 %v575, 0.01
        %v661 = vmul.f32 %v577, 0.01
        %v662 = vmul.f32 %v628, 0.01
        %v663 = vmul.f32 %v630, 0.01
        %v664 = vsel %vm632, %v561, %v648
        %v665 = vsel %vm633, %v563, %v649
        %v666 = vsel %vm634, %v614, %v650
        %v667 = vsel %vm635, %v616, %v651
        %v668 = vsel %vm636, %v565, %v652
        %v669 = vsel %vm637, %v567, %v653
        %v670 = vsel %vm638, %v618, %v654
        %v671 = vsel %vm639, %v620, %v655
        %v672 = vsel %vm640, %v571, %v656
        %v673 = vsel %vm641, %v573, %v657
        %v674 = vsel %vm642, %v624, %v658
        %v675 = vsel %vm643, %v626, %v659
        %v676 = vsel %vm644, %v575, %v660
        %v677 = vsel %vm645, %v577, %v661
        %v678 = vsel %vm646, %v628, %v662
        %v679 = vsel %vm647, %v630, %v663
        %v680 = vpack.c.bf16 %v668, %v664
        %v681 = vpack.c.bf16 %v669, %v665
        %v682 = vpack.c.bf16 %v670, %v666
        %v683 = vpack.c.bf16 %v671, %v667
        %v684 = vpack.c.bf16 %v676, %v672
        %v685 = vpack.c.bf16 %v677, %v673
        %v686 = vpack.c.bf16 %v678, %v674
        %v687 = vpack.c.bf16 %v679, %v675
        %689 = vset.pattern.permute.xlu0 0
        %690 = vperm.xlu0 %689, %v450
        %v691 = vpop.permute.xlu0 %690
        %vm693 = vcmask 261120
        %v695 = vsel %vm693, %v449, 0
        %697 = vmatprep.subr.bf16.mxu0 0
        %698 = vmatpush1.bf16.msra.mxu0 0
        %699 = vmatprep.subr.bf16.mxu0 0
        %700 = vmatpush1.bf16.msra.mxu0 0
        %701 = vmatprep.subr.bf16.mxu0 0
        %702 = vmatpush1.bf16.msra.mxu0 0
        %703 = vmatprep.subr.bf16.mxu0 0
        %704 = vmatpush1.bf16.msra.mxu0 0
        %705 = vmatprep.subr.bf16.mxu0 0
        %706 = vmatpush1.bf16.msra.mxu0 0
        %707 = vmatprep.subr.bf16.mxu0 0
        %708 = vmatpush1.bf16.msra.mxu0 0
        %709 = vmatprep.subr.bf16.mxu0 %v685
        %710 = vmatpush1.bf16.msra.mxu0 %v684
        %711 = vmatprep.subr.bf16.mxu0 %v681
        %712 = vmatpush1.bf16.msra.mxu0 %v680
        %713 = vmatprep.subr.bf16.mxu0 0
        %714 = vmatpush2.bf16.msra.mxu0 0
        %715 = vmatprep.subr.bf16.mxu0 0
        %716 = vmatpush2.bf16.msra.mxu0 0
        %717 = vmatprep.subr.bf16.mxu0 0
        %718 = vmatpush2.bf16.msra.mxu0 0
        %719 = vmatprep.subr.bf16.mxu0 0
        %720 = vmatpush2.bf16.msra.mxu0 0
        %721 = vmatprep.subr.bf16.mxu0 0
        %722 = vmatpush2.bf16.msra.mxu0 0
        %723 = vmatprep.subr.bf16.mxu0 0
        %724 = vmatpush2.bf16.msra.mxu0 0
        %725 = vmatprep.subr.bf16.mxu0 0
        %726 = vmatpush2.bf16.msra.mxu0 0
        %727 = vmatprep.subr.bf16.mxu0 0
        %728 = vmatpush2.bf16.msra.mxu0 0
        %729 = vmatprep.mubr.bf16.mxu0 0
        %730 = vmatmul.mubr.bf16.gmra.mxu0 %v695
        %v731 = vpop.f32.mrf.mxu0
        %v732 = vadd.f32 %v691, %v731
        %v733 = vpop.f32.mrf.mxu0
        %v734 = vadd.f32 %v691, %v733
        %v735 = vpop.f32.mrf.mxu0
        %v736 = vpop.f32.mrf.mxu0
        %737 = vdwg.mxu0
        %738 = vmatprep.subr.bf16.mxu0 0
        %739 = vmatpush1.bf16.msra.mxu0 0
        %740 = vmatprep.subr.bf16.mxu0 0
        %741 = vmatpush1.bf16.msra.mxu0 0
        %742 = vmatprep.subr.bf16.mxu0 0
        %743 = vmatpush1.bf16.msra.mxu0 0
        %744 = vmatprep.subr.bf16.mxu0 0
        %745 = vmatpush1.bf16.msra.mxu0 0
        %746 = vmatprep.subr.bf16.mxu0 0
        %747 = vmatpush1.bf16.msra.mxu0 0
        %748 = vmatprep.subr.bf16.mxu0 0
        %749 = vmatpush1.bf16.msra.mxu0 0
        %750 = vmatprep.subr.bf16.mxu0 %v687
        %751 = vmatpush1.bf16.msra.mxu0 %v686
        %752 = vmatprep.subr.bf16.mxu0 %v683
        %753 = vmatpush1.bf16.msra.mxu0 %v682
        %754 = vmatprep.subr.bf16.mxu0 0
        %755 = vmatpush2.bf16.msra.mxu0 0
        %756 = vmatprep.subr.bf16.mxu0 0
        %757 = vmatpush2.bf16.msra.mxu0 0
        %758 = vmatprep.subr.bf16.mxu0 0
        %759 = vmatpush2.bf16.msra.mxu0 0
        %760 = vmatprep.subr.bf16.mxu0 0
        %761 = vmatpush2.bf16.msra.mxu0 0
        %762 = vmatprep.subr.bf16.mxu0 0
        %763 = vmatpush2.bf16.msra.mxu0 0
        %764 = vmatprep.subr.bf16.mxu0 0
        %765 = vmatpush2.bf16.msra.mxu0 0
        %766 = vmatprep.subr.bf16.mxu0 0
        %767 = vmatpush2.bf16.msra.mxu0 0
        %768 = vmatprep.subr.bf16.mxu0 0
        %769 = vmatpush2.bf16.msra.mxu0 0
        %770 = vmatprep.mubr.bf16.mxu0 0
        %771 = vmatmul.mubr.bf16.gmra.mxu0 %v695
        %v772 = vpop.f32.mrf.mxu0
        %v773 = vadd.f32 %v691, %v772
        %v774 = vpop.f32.mrf.mxu0
        %v775 = vadd.f32 %v691, %v774
        %v776 = vpop.f32.mrf.mxu0
        %v777 = vpop.f32.mrf.mxu0
        %778 = vdwg.mxu0
        %780 = vset.pattern.permute.xlu0 0
        %781 = vperm.xlu0 %780, %v452
        %v782 = vpop.permute.xlu0 %781
        %v785 = vsel %vm693, %v451, 0
        %787 = vmatprep.subr.bf16.mxu0 0
        %788 = vmatpush1.bf16.msra.mxu0 0
        %789 = vmatprep.subr.bf16.mxu0 0
        %790 = vmatpush1.bf16.msra.mxu0 0
        %791 = vmatprep.subr.bf16.mxu0 0
        %792 = vmatpush1.bf16.msra.mxu0 0
        %793 = vmatprep.subr.bf16.mxu0 0
        %794 = vmatpush1.bf16.msra.mxu0 0
        %795 = vmatprep.subr.bf16.mxu0 0
        %796 = vmatpush1.bf16.msra.mxu0 0
        %797 = vmatprep.subr.bf16.mxu0 0
        %798 = vmatpush1.bf16.msra.mxu0 0
        %799 = vmatprep.subr.bf16.mxu0 %v685
        %800 = vmatpush1.bf16.msra.mxu0 %v684
        %801 = vmatprep.subr.bf16.mxu0 %v681
        %802 = vmatpush1.bf16.msra.mxu0 %v680
        %803 = vmatprep.subr.bf16.mxu0 0
        %804 = vmatpush2.bf16.msra.mxu0 0
        %805 = vmatprep.subr.bf16.mxu0 0
        %806 = vmatpush2.bf16.msra.mxu0 0
        %807 = vmatprep.subr.bf16.mxu0 0
        %808 = vmatpush2.bf16.msra.mxu0 0
        %809 = vmatprep.subr.bf16.mxu0 0
        %810 = vmatpush2.bf16.msra.mxu0 0
        %811 = vmatprep.subr.bf16.mxu0 0
        %812 = vmatpush2.bf16.msra.mxu0 0
        %813 = vmatprep.subr.bf16.mxu0 0
        %814 = vmatpush2.bf16.msra.mxu0 0
        %815 = vmatprep.subr.bf16.mxu0 0
        %816 = vmatpush2.bf16.msra.mxu0 0
        %817 = vmatprep.subr.bf16.mxu0 0
        %818 = vmatpush2.bf16.msra.mxu0 0
        %819 = vmatprep.mubr.bf16.mxu0 0
        %820 = vmatmul.mubr.bf16.gmra.mxu0 %v785
        %v821 = vpop.f32.mrf.mxu0
        %v822 = vadd.f32 %v782, %v821
        %v823 = vpop.f32.mrf.mxu0
        %v824 = vadd.f32 %v782, %v823
        %v825 = vpop.f32.mrf.mxu0
        %v826 = vpop.f32.mrf.mxu0
        %827 = vdwg.mxu0
        %828 = vmatprep.subr.bf16.mxu0 0
        %829 = vmatpush1.bf16.msra.mxu0 0
        %830 = vmatprep.subr.bf16.mxu0 0
        %831 = vmatpush1.bf16.msra.mxu0 0
        %832 = vmatprep.subr.bf16.mxu0 0
        %833 = vmatpush1.bf16.msra.mxu0 0
        %834 = vmatprep.subr.bf16.mxu0 0
        %835 = vmatpush1.bf16.msra.mxu0 0
        %836 = vmatprep.subr.bf16.mxu0 0
        %837 = vmatpush1.bf16.msra.mxu0 0
        %838 = vmatprep.subr.bf16.mxu0 0
        %839 = vmatpush1.bf16.msra.mxu0 0
        %840 = vmatprep.subr.bf16.mxu0 %v687
        %841 = vmatpush1.bf16.msra.mxu0 %v686
        %842 = vmatprep.subr.bf16.mxu0 %v683
        %843 = vmatpush1.bf16.msra.mxu0 %v682
        %844 = vmatprep.subr.bf16.mxu0 0
        %845 = vmatpush2.bf16.msra.mxu0 0
        %846 = vmatprep.subr.bf16.mxu0 0
        %847 = vmatpush2.bf16.msra.mxu0 0
        %848 = vmatprep.subr.bf16.mxu0 0
        %849 = vmatpush2.bf16.msra.mxu0 0
        %850 = vmatprep.subr.bf16.mxu0 0
        %851 = vmatpush2.bf16.msra.mxu0 0
        %852 = vmatprep.subr.bf16.mxu0 0
        %853 = vmatpush2.bf16.msra.mxu0 0
        %854 = vmatprep.subr.bf16.mxu0 0
        %855 = vmatpush2.bf16.msra.mxu0 0
        %856 = vmatprep.subr.bf16.mxu0 0
        %857 = vmatpush2.bf16.msra.mxu0 0
        %858 = vmatprep.subr.bf16.mxu0 0
        %859 = vmatpush2.bf16.msra.mxu0 0
        %860 = vmatprep.mubr.bf16.mxu0 0
        %861 = vmatmul.mubr.bf16.gmra.mxu0 %v785
        %v862 = vpop.f32.mrf.mxu0
        %v863 = vadd.f32 %v782, %v862
        %v864 = vpop.f32.mrf.mxu0
        %v865 = vadd.f32 %v782, %v864
        %v866 = vpop.f32.mrf.mxu0
        %v867 = vpop.f32.mrf.mxu0
        %868 = vdwg.mxu0
        %870 = vset.pattern.permute.xlu0 0
        %871 = vperm.xlu0 %870, %v454
        %v872 = vpop.permute.xlu0 %871
        %v875 = vsel %vm693, %v453, 0
        %877 = vmatprep.subr.bf16.mxu0 0
        %878 = vmatpush1.bf16.msra.mxu0 0
        %879 = vmatprep.subr.bf16.mxu0 0
        %880 = vmatpush1.bf16.msra.mxu0 0
        %881 = vmatprep.subr.bf16.mxu0 0
        %882 = vmatpush1.bf16.msra.mxu0 0
        %883 = vmatprep.subr.bf16.mxu0 0
        %884 = vmatpush1.bf16.msra.mxu0 0
        %885 = vmatprep.subr.bf16.mxu0 0
        %886 = vmatpush1.bf16.msra.mxu0 0
        %887 = vmatprep.subr.bf16.mxu0 0
        %888 = vmatpush1.bf16.msra.mxu0 0
        %889 = vmatprep.subr.bf16.mxu0 %v685
        %890 = vmatpush1.bf16.msra.mxu0 %v684
        %891 = vmatprep.subr.bf16.mxu0 %v681
        %892 = vmatpush1.bf16.msra.mxu0 %v680
        %893 = vmatprep.subr.bf16.mxu0 0
        %894 = vmatpush2.bf16.msra.mxu0 0
        %895 = vmatprep.subr.bf16.mxu0 0
        %896 = vmatpush2.bf16.msra.mxu0 0
        %897 = vmatprep.subr.bf16.mxu0 0
        %898 = vmatpush2.bf16.msra.mxu0 0
        %899 = vmatprep.subr.bf16.mxu0 0
        %900 = vmatpush2.bf16.msra.mxu0 0
        %901 = vmatprep.subr.bf16.mxu0 0
        %902 = vmatpush2.bf16.msra.mxu0 0
        %903 = vmatprep.subr.bf16.mxu0 0
        %904 = vmatpush2.bf16.msra.mxu0 0
        %905 = vmatprep.subr.bf16.mxu0 0
        %906 = vmatpush2.bf16.msra.mxu0 0
        %907 = vmatprep.subr.bf16.mxu0 0
        %908 = vmatpush2.bf16.msra.mxu0 0
        %909 = vmatprep.mubr.bf16.mxu0 0
        %910 = vmatmul.mubr.bf16.gmra.mxu0 %v875
        %v911 = vpop.f32.mrf.mxu0
        %v912 = vadd.f32 %v872, %v911
        %v913 = vpop.f32.mrf.mxu0
        %v914 = vadd.f32 %v872, %v913
        %v915 = vpop.f32.mrf.mxu0
        %v916 = vpop.f32.mrf.mxu0
        %917 = vdwg.mxu0
        %918 = vmatprep.subr.bf16.mxu0 0
        %919 = vmatpush1.bf16.msra.mxu0 0
        %920 = vmatprep.subr.bf16.mxu0 0
        %921 = vmatpush1.bf16.msra.mxu0 0
        %922 = vmatprep.subr.bf16.mxu0 0
        %923 = vmatpush1.bf16.msra.mxu0 0
        %924 = vmatprep.subr.bf16.mxu0 0
        %925 = vmatpush1.bf16.msra.mxu0 0
        %926 = vmatprep.subr.bf16.mxu0 0
        %927 = vmatpush1.bf16.msra.mxu0 0
        %928 = vmatprep.subr.bf16.mxu0 0
        %929 = vmatpush1.bf16.msra.mxu0 0
        %930 = vmatprep.subr.bf16.mxu0 %v687
        %931 = vmatpush1.bf16.msra.mxu0 %v686
        %932 = vmatprep.subr.bf16.mxu0 %v683
        %933 = vmatpush1.bf16.msra.mxu0 %v682
        %934 = vmatprep.subr.bf16.mxu0 0
        %935 = vmatpush2.bf16.msra.mxu0 0
        %936 = vmatprep.subr.bf16.mxu0 0
        %937 = vmatpush2.bf16.msra.mxu0 0
        %938 = vmatprep.subr.bf16.mxu0 0
        %939 = vmatpush2.bf16.msra.mxu0 0
        %940 = vmatprep.subr.bf16.mxu0 0
        %941 = vmatpush2.bf16.msra.mxu0 0
        %942 = vmatprep.subr.bf16.mxu0 0
        %943 = vmatpush2.bf16.msra.mxu0 0
        %944 = vmatprep.subr.bf16.mxu0 0
        %945 = vmatpush2.bf16.msra.mxu0 0
        %946 = vmatprep.subr.bf16.mxu0 0
        %947 = vmatpush2.bf16.msra.mxu0 0
        %948 = vmatprep.subr.bf16.mxu0 0
        %949 = vmatpush2.bf16.msra.mxu0 0
        %950 = vmatprep.mubr.bf16.mxu0 0
        %951 = vmatmul.mubr.bf16.gmra.mxu0 %v875
        %v952 = vpop.f32.mrf.mxu0
        %v953 = vadd.f32 %v872, %v952
        %v954 = vpop.f32.mrf.mxu0
        %v955 = vadd.f32 %v872, %v954
        %v956 = vpop.f32.mrf.mxu0
        %v957 = vpop.f32.mrf.mxu0
        %958 = vdwg.mxu0
        %v963 = vcombine.low %v732, %v734
        %v964 = vcombine.low %v773, %v775
        %967 = vst [vmem:[%s412] sm:$0xff] %v963
        %968 = vst [vmem:[%s412 + $0x8] sm:$0xff] %v964
        %v969 = vmul.f32 %v822, 1.442695
        %v970 = vpow.pop %v969
        %v971 = vmul.f32 %v824, 1.442695
        %v972 = vpow.pop %v971
        %v973 = vmul.f32 %v863, 1.442695
        %v974 = vpow.pop %v973
        %v975 = vmul.f32 %v865, 1.442695
        %v976 = vpow.pop %v975
        %v977 = vadd.f32 %v970, 1e-05
        %v978 = vadd.f32 %v972, 1e-05
        %v979 = vadd.f32 %v974, 1e-05
        %v980 = vadd.f32 %v976, 1e-05
        %v983 = vlaneseq
        %v984 = vshrl.u32 %v983, 7
        %v985 = vsub.s32 3, %v984
        %v986 = vrot.slane %v456, %v985
        %v987 = vlaneseq
        %v988 = vshrl.u32 %v987, 7
        %v989 = vsub.s32 7, %v988
        %v990 = vrot.slane %v456, %v989
        %v991 = vlaneseq
        %v992 = vshrl.u32 %v991, 7
        %v993 = vsub.s32 3, %v992
        %v994 = vrot.slane %v457, %v993
        %v995 = vlaneseq
        %v996 = vshrl.u32 %v995, 7
        %v997 = vsub.s32 7, %v996
        %v998 = vrot.slane %v457, %v997
        %v1003 = vlaneseq
        %v1004 = vshrl.u32 %v1003, 7
        %v1005 = vsub.s32 3, %v1004
        %v1006 = vrot.slane %v986, %v1005
        %v1007 = vlaneseq
        %v1008 = vshrl.u32 %v1007, 7
        %v1009 = vsub.s32 3, %v1008
        %v1010 = vrot.slane %v990, %v1009
        %v1011 = vlaneseq
        %v1012 = vshrl.u32 %v1011, 7
        %v1013 = vsub.s32 3, %v1012
        %v1014 = vrot.slane %v994, %v1013
        %v1015 = vlaneseq
        %v1016 = vshrl.u32 %v1015, 7
        %v1017 = vsub.s32 3, %v1016
        %v1018 = vrot.slane %v998, %v1017
        %v1019 = vmul.f32 %v977, %v1006
        %v1020 = vmul.f32 %v978, %v1010
        %v1021 = vmul.f32 %v979, %v1014
        %v1022 = vmul.f32 %v980, %v1018
        %v1023 = vadd.f32 %v1019, 1e-05
        %v1024 = vadd.f32 %v1020, 1e-05
        %v1025 = vadd.f32 %v1021, 1e-05
        %v1026 = vadd.f32 %v1022, 1e-05
        %v1031 = vcombine.low %v1023, %v1024
        %v1032 = vcombine.low %v1025, %v1026
        %1035 = vst [vmem:[%s419] sm:$0xff] %v1031
        %1036 = vst [vmem:[%s419 + $0x8] sm:$0xff] %v1032
        %v1037 = vmul.f32 %v912, %v1006
        %v1038 = vmul.f32 %v914, %v1010
        %v1039 = vmul.f32 %v953, %v1014
        %v1040 = vmul.f32 %v955, %v1018
        %1041 = vst [vmem:[%s426] sm:$0xff] %v1037
        %1042 = vst [vmem:[%s426 + $0x8] sm:$0xff] %v1038
        %1043 = vst [vmem:[%s426 + $0x10] sm:$0xff] %v1039
        %1044 = vst [vmem:[%s426 + $0x18] sm:$0xff] %v1040
        %s1045 = sand.u32 %s247, 1
        %s1046 = scalar_lea.sflag [#allocation3], %s1045
        %s1047 = sand.u32 %s247, 1
        %s1048 = smul.addr %s1047, 16
        %s1049 = scalar_lea.vmem [#allocation2], %s1048
        %s1050 = sand.u32 %s29, 1
        %s1051 = scalar_lea.sflag [#allocation5], %s1050
        %s1052 = sand.u32 %s275, 1
        %s1053 = smul.addr %s1052, 16
        %s1054 = scalar_lea.vmem [#allocation4], %s1053
        %s1055 = sand.u32 %s29, 1
        %s1056 = scalar_lea.sflag [#allocation5], %s1055
        %s1057 = sand.u32 %s303, 1
        %s1058 = smul.addr %s1057, 32
        %s1059 = scalar_lea.vmem [#allocation6], %s1058
        // Predicated region
        $region57: #{tpu_custom_call.1} parent=55 // pred_check
          %p1060 = pneg %p257
        $region58: #{tpu_custom_call.1} parent=55 // pred_check_branch
          %1062 = sbr.rel (%p1060) target = $region60
        $region59: #{tpu_custom_call.1} parent=55 // pred_region
          %s1063 = smul.u32 4, %s34
          %s1065 = ssub.s32 256, 256
          %1066 = vsyncadd %s1046, %s1065
          %s1067 = smul.addr %s33, 4
          %s1068 = sadd.s32 %s1063, %s1067
          %s1069 = smul.addr %s1068, 64
          %s1070 = scalar_lea.hbm %s9, %s1069
          %s1072 = sshll.u32 %s1049, 4
          %s1073 = int_to_ptr.vmem [resolvable:$true] %s1072
          %1075 = dma.vmem_to_hbm [thread:$0]  %s1073, 256, %s1070, %s1046
        $region60: #{tpu_custom_call.1} parent=55 // pred_fallthru
          _
        // Predicated region
        $region61: #{tpu_custom_call.1} parent=55 // pred_check
          %p1076 = pneg %p285
        $region62: #{tpu_custom_call.1} parent=55 // pred_check_branch
          %1078 = sbr.rel (%p1076) target = $region64
        $region63: #{tpu_custom_call.1} parent=55 // pred_region
          %s1079 = smul.u32 4, %s34
          %s1081 = ssub.s32 256, 256
          %1082 = vsyncadd %s1051, %s1081
          %s1083 = smul.addr %s33, 4
          %s1084 = sadd.s32 %s1079, %s1083
          %s1085 = smul.addr %s1084, 64
          %s1086 = scalar_lea.hbm %s10, %s1085
          %s1088 = sshll.u32 %s1054, 4
          %s1089 = int_to_ptr.vmem [resolvable:$true] %s1088
          %1091 = dma.vmem_to_hbm [thread:$0]  %s1089, 256, %s1086, %s1051
        $region64: #{tpu_custom_call.1} parent=55 // pred_fallthru
          _
        // Predicated region
        $region65: #{tpu_custom_call.1} parent=55 // pred_check
          %p1092 = pneg %p313
        $region66: #{tpu_custom_call.1} parent=55 // pred_check_branch
          %1094 = sbr.rel (%p1092) target = $region68
        $region67: #{tpu_custom_call.1} parent=55 // pred_region
          %s1095 = smul.u32 4, %s34
          %s1097 = ssub.s32 512, 512
          %1098 = vsyncadd %s1056, %s1097
          %s1099 = smul.addr %s33, 4
          %s1100 = sadd.s32 %s1095, %s1099
          %s1101 = smul.addr %s1100, 128
          %s1102 = scalar_lea.hbm %s11, %s1101
          %s1104 = sshll.u32 %s1059, 4
          %s1105 = int_to_ptr.vmem [resolvable:$true] %s1104
          %1107 = dma.vmem_to_hbm [thread:$0]  %s1105, 512, %s1102, %s1056
        $region68: #{tpu_custom_call.1} parent=55 // pred_fallthru
          _
      $region56: #{tpu_custom_call.1} parent=5 // pred_fallthru
        _
      %p1108 = scmp.le.s32.totalorder 2, %s24
      // Predicated region
      $region69: #{tpu_custom_call.1} parent=5 // pred_check
        %p1109 = pneg %p1108
      $region70: #{tpu_custom_call.1} parent=5 // pred_check_branch
        %1111 = sbr.rel (%p1109) target = $region72
      $region71: #{tpu_custom_call.1} parent=5 // pred_region
        %s1112 = ssub.s32 %s24, 2
        // Predicated region
        $region73: #{tpu_custom_call.1} parent=71 // pred_check
          %p1113 = pneg %p263
        $region74: #{tpu_custom_call.1} parent=71 // pred_check_branch
          %1115 = sbr.rel (%p1113) target = $region76
        $region75: #{tpu_custom_call.1} parent=71 // pred_region
          %s1116 = sand.u32 %s248, 1
          %s1117 = scalar_lea.sflag [#allocation3], %s1116
          %s1118 = sand.u32 %s248, 1
          %s1119 = smul.addr %s1118, 16
          %s1120 = scalar_lea.vmem [#allocation2], %s1119
          %1121 = dma.done %s1117, 256
        $region76: #{tpu_custom_call.1} parent=71 // pred_fallthru
          _
        // Predicated region
        $region77: #{tpu_custom_call.1} parent=71 // pred_check
          %p1122 = pneg %p291
        $region78: #{tpu_custom_call.1} parent=71 // pred_check_branch
          %1124 = sbr.rel (%p1122) target = $region80
        $region79: #{tpu_custom_call.1} parent=71 // pred_region
          %s1125 = sand.u32 %s30, 1
          %s1126 = scalar_lea.sflag [#allocation5], %s1125
          %s1127 = sand.u32 %s276, 1
          %s1128 = smul.addr %s1127, 16
          %s1129 = scalar_lea.vmem [#allocation4], %s1128
          %1130 = dma.done %s1126, 256
        $region80: #{tpu_custom_call.1} parent=71 // pred_fallthru
          _
        // Predicated region
        $region81: #{tpu_custom_call.1} parent=71 // pred_check
          %p1131 = pneg %p319
        $region82: #{tpu_custom_call.1} parent=71 // pred_check_branch
          %1133 = sbr.rel (%p1131) target = $region84
        $region83: #{tpu_custom_call.1} parent=71 // pred_region
          %s1134 = sand.u32 %s30, 1
          %s1135 = scalar_lea.sflag [#allocation5], %s1134
          %s1136 = sand.u32 %s304, 1
          %s1137 = smul.addr %s1136, 32
          %s1138 = scalar_lea.vmem [#allocation6], %s1137
          %1139 = dma.done %s1135, 512
        $region84: #{tpu_custom_call.1} parent=71 // pred_fallthru
          _
      $region72: #{tpu_custom_call.1} parent=5 // pred_fallthru
        _
    $region6: #{tpu_custom_call.1} parent=1 // loop_footer
      %s28 = sadd.s32 1, %s24
    $region7: #{tpu_custom_call.1} parent=1 // loop_footer_branch
      %23 = sbr.rel target = $region3
    $region8: #{tpu_custom_call.1} parent=1 // loop_exit
      _
    %1140 = vsyncpa [#allocation3], 1
    %s1141 = scalar_lea.sflag [#allocation3], 1
    %1142 = vsyncpa %s1141, 1
    %1143 = vsyncpa [#allocation5], 1
    %s1144 = scalar_lea.sflag [#allocation5], 1
    %1145 = vsyncpa %s1144, 1

</llo_original>
